<compile_context>
chip_gen: v5e
topology: v5e:2x2
jax: 0.10.0
libtpu: 0.0.40
codegen_flags: <defaults>
</compile_context>

<pallas_src>
import functools

import jax
import jax.numpy as jnp
from jax.experimental import pallas as pl
from jax.experimental.pallas import tpu as pltpu


def _mlp_kernel(x_ref, w0_ref, b0_ref, wh_ref, bh_ref, wl_ref, bl_ref, o_ref,
                *, num_hidden_layers):
    # x_ref : (2, TM)             -- transposed collocation points (lane-dense)
    # w0_ref: (H, 2),             b0_ref: (H, 1)
    # wh_ref: (max(L-1,1), H, H), bh_ref: (max(L-1,1), H, 1)
    # wl_ref: (H, 1),             bl_ref: (1, 1)
    # o_ref : (1, TM)             -- lane-dense output row
    x0 = x_ref[0:1, :]                       # (1, TM)
    x1 = x_ref[1:2, :]                       # (1, TM)

    # First hidden layer on the VPU: K=2 would waste the whole MXU depth.
    h = jnp.tanh(w0_ref[:, 0:1] * x0 + w0_ref[:, 1:2] * x1 + b0_ref[...])

    # Remaining hidden layers: Linear(H -> H) + tanh on the MXU.
    n_mid = num_hidden_layers - 1

    def layer(i, h):
        # jnp.tanh lowers to the EUP; keep it (approx-reciprocal rewrite
        # would risk the 1e-4 tolerance vs the reference).
        return jnp.tanh(
            jnp.dot(wh_ref[i], h, preferred_element_type=jnp.float32) + bh_ref[i]
        )

    if n_mid <= 8:
        # Static unroll: full LLO scheduler visibility across layers. h is
        # re-materialized through VMEM each layer (a (32,TM) f32 tile exceeds
        # the 64-vreg file), so unrolling does not inflate vreg live ranges.
        for i in range(n_mid):
            h = layer(i, h)
    else:
        # Very deep stacks: partially-unrolled loop bounds compile time while
        # still exposing cross-iteration scheduling to the LLO.
        h = jax.lax.fori_loop(0, n_mid, layer, h, unroll=2)

    # Output layer Linear(H -> 1): broadcast-multiply + cross-sublane reduce;
    # result stays lane-dense -> full-lane store.
    out = jnp.sum(h * wl_ref[...], axis=0, keepdims=True) + bl_ref[...]
    o_ref[...] = out.astype(o_ref.dtype)


def make_params(num_hidden_layers, units_per_layer, key):
    """Xavier-normal weights, zero biases (matches the torch init).

    Weights are stored in torch (out_features, in_features) layout so the
    kernel computes W @ x_t directly on the transposed activations; the final
    layer weight is stored as (H, 1) so it broadcasts over the lane axis.
    """
    H = units_per_layer
    keys = jax.random.split(key, num_hidden_layers + 1)

    def xavier(k, fan_in, fan_out, shape):
        std = (2.0 / (fan_in + fan_out)) ** 0.5
        return (std * jax.random.normal(k, shape)).astype(jnp.float32)

    w0 = xavier(keys[0], 2, H, (H, 2))
    b0 = jnp.zeros((H, 1), jnp.float32)

    if num_hidden_layers > 1:
        wh = jnp.stack(
            [xavier(keys[i], H, H, (H, H)) for i in range(1, num_hidden_layers)]
        )
        bh = jnp.zeros((num_hidden_layers - 1, H, 1), jnp.float32)
    else:
        # No middle layers: dummy block, never read by the kernel loop.
        wh = jnp.zeros((1, H, H), jnp.float32)
        bh = jnp.zeros((1, H, 1), jnp.float32)

    wl = xavier(keys[num_hidden_layers], H, 1, (H, 1))
    bl = jnp.zeros((1, 1), jnp.float32)
    return w0, b0, wh, bh, wl, bl


def _pick_tm(n128, cap=8192):
    """Pick a row tile (multiple of 128 lanes).

    Goals: (a) at least 2 grid steps whenever N > 128 so the "parallel" grid
    axis shards rows across v7x's two TensorCores; (b) an even number of steps
    so both cores get equal work; (c) tiles as large as possible (cap = 8192
    lanes) to amortize the ~0.35 us per-grid-step overhead on v5e/v6e.
    """
    tm = min(cap, max(128, pl.cdiv(pl.cdiv(n128, 2), 128) * 128))
    n_tiles = pl.cdiv(n128, tm)
    if n_tiles > 1 and n_tiles % 2 == 1:
        # Round the step count up to the next even number and re-derive tm.
        n_tiles += 1
        tm = max(128, pl.cdiv(pl.cdiv(n128, n_tiles), 128) * 128)
    return tm


def network_forward(X, params, num_hidden_layers, *, tm=None):
    """X: (N, 2) float32 -> (N, 1) float32."""
    w0, b0, wh, bh, wl, bl = params
    N = X.shape[0]
    H = w0.shape[0]
    n_mid_blk = wh.shape[0]

    n128 = pl.cdiv(N, 128) * 128
    if tm is None:
        tm = _pick_tm(n128)
    else:
        tm = max(128, pl.cdiv(tm, 128) * 128)
    n_tiles = pl.cdiv(n128, tm)
    N_pad = n_tiles * tm

    # Wrapper-side layout plumbing: present the batch lane-major to the kernel.
    Xt = X.T                                   # (2, N)
    if N_pad != N:
        Xt = jnp.pad(Xt, ((0, 0), (0, N_pad - N)))

    kernel = functools.partial(_mlp_kernel, num_hidden_layers=num_hidden_layers)

    out = pl.pallas_call(
        kernel,
        out_shape=jax.ShapeDtypeStruct((1, N_pad), jnp.float32),
        grid_spec=pltpu.PrefetchScalarGridSpec(
            num_scalar_prefetch=0,
            grid=(n_tiles,),
            in_specs=[
                pl.BlockSpec((2, tm), lambda i: (0, i)),                 # X^T tile
                pl.BlockSpec((H, 2), lambda i: (0, 0)),                  # W0 (resident)
                pl.BlockSpec((H, 1), lambda i: (0, 0)),                  # b0
                pl.BlockSpec((n_mid_blk, H, H), lambda i: (0, 0, 0)),    # Wh
                pl.BlockSpec((n_mid_blk, H, 1), lambda i: (0, 0, 0)),    # bh
                pl.BlockSpec((H, 1), lambda i: (0, 0)),                  # Wl
                pl.BlockSpec((1, 1), lambda i: (0, 0)),                  # bl
            ],
            out_specs=pl.BlockSpec((1, tm), lambda i: (0, i)),           # lane-dense out
        ),
        compiler_params=pltpu.CompilerParams(
            # >= 2 grid steps (by construction of tm) -> rows shard across
            # v7x's two TensorCores; a serial no-op on v5e/v6e.
            dimension_semantics=("parallel",),
        ),
    )(Xt, w0, b0, wh, bh, wl, bl)

    return out.reshape(N_pad, 1)[:N]


def network_forward_ref(X, params, num_hidden_layers):
    """Pure-JAX reference, mathematically identical to the torch forward."""
    w0, b0, wh, bh, wl, bl = params
    # Linear(2->H) written as the same two products + sum the kernel uses.
    h = jnp.tanh(X[:, 0:1] * w0[:, 0] + X[:, 1:2] * w0[:, 1] + b0[:, 0])
    for i in range(num_hidden_layers - 1):
        h = jnp.tanh(h @ wh[i].T + bh[i, :, 0])
    # Linear(H->1).
    return jnp.sum(h * wl[:, 0], axis=-1, keepdims=True) + bl


if __name__ == "__main__":
    num_hidden_layers = 3
    units_per_layer = 32
    N = 200  # not a multiple of 128 -> exercises padding and the 2-tile grid

    key = jax.random.PRNGKey(0)
    pkey, xkey = jax.random.split(key)
    params = make_params(num_hidden_layers, units_per_layer, pkey)

    X = jax.random.uniform(xkey, (N, 2), dtype=jnp.float32)

    out = network_forward(X, params, num_hidden_layers)
    out = jax.block_until_ready(out)

    ref = network_forward_ref(X, params, num_hidden_layers)
    assert out.shape == (N, 1)
    assert jnp.allclose(out, ref, atol=1e-4, rtol=1e-4), "mismatch vs reference"

    print("KERNEL_OK")
</pallas_src>

<mosaic_0001>
module attributes {stable_mosaic.version = 11 : i64} {
  func.func @_mlp_kernel(%arg0: i32, %arg1: memref<2x128xf32, #tpu.memory_space<vmem>>, %arg2: memref<32x2xf32, #tpu.memory_space<vmem>>, %arg3: memref<32x1xf32, #tpu.memory_space<vmem>>, %arg4: memref<2x32x32xf32, #tpu.memory_space<vmem>>, %arg5: memref<2x32x1xf32, #tpu.memory_space<vmem>>, %arg6: memref<32x1xf32, #tpu.memory_space<vmem>>, %arg7: memref<1x1xf32, #tpu.memory_space<vmem>>, %arg8: memref<1x128xf32, #tpu.memory_space<vmem>>) attributes {dimension_semantics = [#tpu.dimension_semantics<parallel>], iteration_bounds = array<i64: 2>, scalar_prefetch = 0 : i64, scratch_operands = 0 : i64, tpu.core_type = #tpu.core_type<tc>, window_params = [{transform_indices = @transform_0, window_bounds = array<i64: 2, 128>}, {pipeline_mode = #tpu.pipeline_mode<synchronous>, transform_indices = @transform_1, window_bounds = array<i64: 32, 2>}, {pipeline_mode = #tpu.pipeline_mode<synchronous>, transform_indices = @transform_2, window_bounds = array<i64: 32, 1>}, {pipeline_mode = #tpu.pipeline_mode<synchronous>, transform_indices = @transform_3, window_bounds = array<i64: 2, 32, 32>}, {pipeline_mode = #tpu.pipeline_mode<synchronous>, transform_indices = @transform_4, window_bounds = array<i64: 2, 32, 1>}, {pipeline_mode = #tpu.pipeline_mode<synchronous>, transform_indices = @transform_5, window_bounds = array<i64: 32, 1>}, {pipeline_mode = #tpu.pipeline_mode<synchronous>, transform_indices = @transform_6, window_bounds = array<i64: 1, 1>}, {transform_indices = @transform_7, window_bounds = array<i64: 1, 128>}]} {
    %c0 = arith.constant 0 : index
    %c0_0 = arith.constant 0 : index
    %0 = vector.load %arg1[%c0, %c0_0] : memref<2x128xf32, #tpu.memory_space<vmem>>, vector<1x128xf32>
    %c1 = arith.constant 1 : index
    %c0_1 = arith.constant 0 : index
    %1 = vector.load %arg1[%c1, %c0_1] : memref<2x128xf32, #tpu.memory_space<vmem>>, vector<1x128xf32>
    %c0_2 = arith.constant 0 : index
    %c0_3 = arith.constant 0 : index
    %2 = vector.load %arg2[%c0_2, %c0_3] : memref<32x2xf32, #tpu.memory_space<vmem>>, vector<32x1xf32>
    %3 = vector.broadcast %2 : vector<32x1xf32> to vector<32x128xf32>
    %4 = vector.broadcast %0 : vector<1x128xf32> to vector<32x128xf32>
    %5 = arith.mulf %3, %4 : vector<32x128xf32>
    %c0_4 = arith.constant 0 : index
    %c1_5 = arith.constant 1 : index
    %6 = vector.load %arg2[%c0_4, %c1_5] : memref<32x2xf32, #tpu.memory_space<vmem>>, vector<32x1xf32>
    %7 = vector.broadcast %6 : vector<32x1xf32> to vector<32x128xf32>
    %8 = vector.broadcast %1 : vector<1x128xf32> to vector<32x128xf32>
    %9 = arith.mulf %7, %8 : vector<32x128xf32>
    %10 = arith.addf %5, %9 : vector<32x128xf32>
    %c0_6 = arith.constant 0 : index
    %c0_7 = arith.constant 0 : index
    %11 = vector.load %arg3[%c0_6, %c0_7] : memref<32x1xf32, #tpu.memory_space<vmem>>, vector<32x1xf32>
    %12 = vector.broadcast %11 : vector<32x1xf32> to vector<32x128xf32>
    %13 = arith.addf %10, %12 : vector<32x128xf32>
    %14 = math.tanh %13 : vector<32x128xf32>
    %c0_8 = arith.constant 0 : index
    %c0_9 = arith.constant 0 : index
    %c0_10 = arith.constant 0 : index
    %15 = vector.load %arg4[%c0_8, %c0_9, %c0_10] : memref<2x32x32xf32, #tpu.memory_space<vmem>>, vector<1x32x32xf32>
    %16 = vector.shape_cast %15 : vector<1x32x32xf32> to vector<32x32xf32>
    %cst = arith.constant dense<0.000000e+00> : vector<32x128xf32>
    %17 = tpu.matmul %16, %14, %cst {dimension_numbers = #tpu.dot_dimension_numbers<[1], [0], [0], [1], [0, 0, 1, 1], [], []>} : vector<32x32xf32>, vector<32x128xf32>, vector<32x128xf32> -> vector<32x128xf32>
    %c0_11 = arith.constant 0 : index
    %c0_12 = arith.constant 0 : index
    %c0_13 = arith.constant 0 : index
    %18 = vector.load %arg5[%c0_11, %c0_12, %c0_13] : memref<2x32x1xf32, #tpu.memory_space<vmem>>, vector<1x32x1xf32>
    %19 = vector.shape_cast %18 : vector<1x32x1xf32> to vector<32x1xf32>
    %20 = vector.broadcast %19 : vector<32x1xf32> to vector<32x128xf32>
    %21 = arith.addf %17, %20 : vector<32x128xf32>
    %22 = math.tanh %21 : vector<32x128xf32>
    %c1_14 = arith.constant 1 : index
    %c0_15 = arith.constant 0 : index
    %c0_16 = arith.constant 0 : index
    %23 = vector.load %arg4[%c1_14, %c0_15, %c0_16] : memref<2x32x32xf32, #tpu.memory_space<vmem>>, vector<1x32x32xf32>
    %24 = vector.shape_cast %23 : vector<1x32x32xf32> to vector<32x32xf32>
    %cst_17 = arith.constant dense<0.000000e+00> : vector<32x128xf32>
    %25 = tpu.matmul %24, %22, %cst_17 {dimension_numbers = #tpu.dot_dimension_numbers<[1], [0], [0], [1], [0, 0, 1, 1], [], []>} : vector<32x32xf32>, vector<32x128xf32>, vector<32x128xf32> -> vector<32x128xf32>
    %c1_18 = arith.constant 1 : index
    %c0_19 = arith.constant 0 : index
    %c0_20 = arith.constant 0 : index
    %26 = vector.load %arg5[%c1_18, %c0_19, %c0_20] : memref<2x32x1xf32, #tpu.memory_space<vmem>>, vector<1x32x1xf32>
    %27 = vector.shape_cast %26 : vector<1x32x1xf32> to vector<32x1xf32>
    %28 = vector.broadcast %27 : vector<32x1xf32> to vector<32x128xf32>
    %29 = arith.addf %25, %28 : vector<32x128xf32>
    %30 = math.tanh %29 : vector<32x128xf32>
    %c0_21 = arith.constant 0 : index
    %c0_22 = arith.constant 0 : index
    %31 = vector.load %arg6[%c0_21, %c0_22] : memref<32x1xf32, #tpu.memory_space<vmem>>, vector<32x1xf32>
    %32 = vector.broadcast %31 : vector<32x1xf32> to vector<32x128xf32>
    %33 = arith.mulf %30, %32 : vector<32x128xf32>
    %cst_23 = arith.constant dense<0.000000e+00> : vector<128xf32>
    %34 = vector.multi_reduction <add>, %33, %cst_23 [0] : vector<32x128xf32> to vector<128xf32>
    %35 = vector.shape_cast %34 : vector<128xf32> to vector<1x128xf32>
    %c0_24 = arith.constant 0 : index
    %c0_25 = arith.constant 0 : index
    %36 = vector.load %arg7[%c0_24, %c0_25] : memref<1x1xf32, #tpu.memory_space<vmem>>, vector<1x1xf32>
    %37 = vector.broadcast %36 : vector<1x1xf32> to vector<1x128xf32>
    %38 = arith.addf %35, %37 : vector<1x128xf32>
    %c0_26 = arith.constant 0 : index
    %c0_27 = arith.constant 0 : index
    %39 = vector.load %arg8[%c0_26, %c0_27] : memref<1x128xf32, #tpu.memory_space<vmem>>, vector<1x128xf32>
    tpu.vector_store %arg8[%c0_26, %c0_27], %38 {strides = array<i32>} : memref<1x128xf32, #tpu.memory_space<vmem>>, vector<1x128xf32>,
    return
  }
  func.func @transform_0(%arg0: i32) -> (i32, i32) {
    %c0_i32 = arith.constant 0 : i32
    %c0_i32_0 = arith.constant 0 : i32
    return %c0_i32, %arg0 : i32, i32
  }
  func.func @transform_1(%arg0: i32) -> (i32, i32) {
    %c0_i32 = arith.constant 0 : i32
    %c0_i32_0 = arith.constant 0 : i32
    %c0_i32_1 = arith.constant 0 : i32
    return %c0_i32, %c0_i32_0 : i32, i32
  }
  func.func @transform_2(%arg0: i32) -> (i32, i32) {
    %c0_i32 = arith.constant 0 : i32
    %c0_i32_0 = arith.constant 0 : i32
    %c0_i32_1 = arith.constant 0 : i32
    return %c0_i32, %c0_i32_0 : i32, i32
  }
  func.func @transform_3(%arg0: i32) -> (i32, i32, i32) {
    %c0_i32 = arith.constant 0 : i32
    %c0_i32_0 = arith.constant 0 : i32
    %c0_i32_1 = arith.constant 0 : i32
    %c0_i32_2 = arith.constant 0 : i32
    return %c0_i32, %c0_i32_0, %c0_i32_1 : i32, i32, i32
  }
  func.func @transform_4(%arg0: i32) -> (i32, i32, i32) {
    %c0_i32 = arith.constant 0 : i32
    %c0_i32_0 = arith.constant 0 : i32
    %c0_i32_1 = arith.constant 0 : i32
    %c0_i32_2 = arith.constant 0 : i32
    return %c0_i32, %c0_i32_0, %c0_i32_1 : i32, i32, i32
  }
  func.func @transform_5(%arg0: i32) -> (i32, i32) {
    %c0_i32 = arith.constant 0 : i32
    %c0_i32_0 = arith.constant 0 : i32
    %c0_i32_1 = arith.constant 0 : i32
    return %c0_i32, %c0_i32_0 : i32, i32
  }
  func.func @transform_6(%arg0: i32) -> (i32, i32) {
    %c0_i32 = arith.constant 0 : i32
    %c0_i32_0 = arith.constant 0 : i32
    %c0_i32_1 = arith.constant 0 : i32
    return %c0_i32, %c0_i32_0 : i32, i32
  }
  func.func @transform_7(%arg0: i32) -> (i32, i32) {
    %c0_i32 = arith.constant 0 : i32
    %c0_i32_0 = arith.constant 0 : i32
    return %c0_i32, %arg0 : i32, i32
  }
}

</mosaic_0001>

<llo_original>
// kernel: tpu_custom_call.1
$region0: #{tpu_custom_call.1}
  #allocation0 [shape = 'u32[]', space=smem, size = 0x4, offset = 0x4, fixed_abs, tag = 'smem constant byte address 0x4 - core index']
  #allocation1 [shape = 'u32[72,128]{1,0:T(1,128)}', space=vmem, size = 0x9000, scoped, tag = 'internal scratch']
  #allocation2 [shape = 'f32[1,1]{1,0:T(1,128)S(1)}', space=vmem, size = 0x200, scoped, tag = 'scoped memory for tpu_custom_call.1']
  %s0 = inlined_call_operand.vmem [shape: f32[2,256], index: 0, kind: input, shape index: {}]
  %s1 = inlined_call_operand.vmem [shape: f32[32,2], index: 1, kind: input, shape index: {}]
  %s2 = inlined_call_operand.vmem [shape: f32[32,1], index: 2, kind: input, shape index: {}]
  %s3 = inlined_call_operand.vmem [shape: f32[2,32,32], index: 3, kind: input, shape index: {}]
  %s4 = inlined_call_operand.vmem [shape: f32[2,32,1], index: 4, kind: input, shape index: {}]
  %s5 = inlined_call_operand.vmem [shape: f32[32,1], index: 5, kind: input, shape index: {}]
  %s6 = inlined_call_operand.<no memory space> [shape: f32[1,1], index: 6, kind: input, shape index: {}]
  %s7 = inlined_call_operand.hbm [shape: f32[1,256], index: 7, kind: output, shape index: {}]
  %s8 = sld [smem:[#allocation0]]
  $region61: #{tpu_custom_call.1} parent=0
    _
  %s10 = ssub.s32 1, %s8
  %s11 = scalar_select 0, %s10, %s8
  %v12 = vstv %s6
  %13 = vst [vmem:[#allocation2] sm:$0x1] %v12
  $region1: #{tpu_custom_call.1} parent=0
    #allocation3 [shape = 'u8[1024]{0}', space=vmem, size = 0x400, scoped, tag = 'output window, operand 0']
    #allocation4 [shape = 's32[2]{0}', space=sflag, size = 0x8, scoped, tag = 'scoped memory for tpu_custom_call.1']
    %14 = vsyncpa [#allocation4], 0
    %s15 = scalar_lea.sflag [#allocation4], 1
    %16 = vsyncpa %s15, 0
    loop: start=0, step=1, limit=4
    $region2: #{tpu_custom_call.1} parent=1 // loop_pre_header
      _
    $region3: #{tpu_custom_call.1} parent=1 // loop_header
      %s18 = sphi 0, %s22
      %p19 = scmp.ge.s32.totalorder %s18, 4
      %s28 = sphi 0, %s30
      %s31 = sphi 0, %s28
      %s32 = sphi 0, %s31
      %s48 = sphi 0, %s32
      %s52 = sphi 0, %s52
      %s54 = sphi 0, %s52
      %s55 = sphi 0, %s54
      %s69 = sphi 0, %s55
      %s73 = sphi 0, %s73
      %s75 = sphi 0, %s73
      %s76 = sphi 0, %s75
      %s90 = sphi 0, %s76
      %s94 = sphi 0, %s94
      %s96 = sphi 0, %s94
      %s97 = sphi 0, %s96
      %s111 = sphi 0, %s97
      %s115 = sphi 0, %s115
      %s117 = sphi 0, %s115
      %s118 = sphi 0, %s117
      %s132 = sphi 0, %s118
      %s136 = sphi 0, %s136
      %s138 = sphi 0, %s136
      %s139 = sphi 0, %s138
      %s153 = sphi 0, %s139
      %s157 = sphi 0, %s157
      %s159 = sphi 0, %s157
      %s160 = sphi 0, %s159
      %s174 = sphi 0, %s160
      %s180 = sphi 0, %s182
      %s183 = sphi 0, %s180
      %s184 = sphi 0, %s183
      %s200 = sphi 0, %s184
    $region4: #{tpu_custom_call.1} parent=1 // loop_header_branch
      %21 = sbr.rel (%p19) target = $region8
    $region5: #{tpu_custom_call.1} parent=1 // loop_body
      %s23 = ssub.s32 %s18, 1
      %s24 = ssub.s32 %s18, 2
      %s25 = sadd.s32 %s18, 1
      %s26 = ssub.s32 %s18, %s25
      %p27 = scmp.eq.s32.totalorder %s26, 0
      %s29 = sadd.s32 %s28, 1
      %s30 = scalar_select %p27, %s28, %s29
      %p33 = pneg %p27
      %p34 = scmp.eq.s32.totalorder %s18, 1
      %p35 = por %p33, %p34
      %p36 = scmp.ne.s32.totalorder %s28, %s31
      %p37 = scmp.eq.s32.totalorder %s18, 0
      %p38 = por %p36, %p37
      %p39 = scmp.ne.s32.totalorder %s28, %s31
      %p40 = scmp.eq.s32.totalorder %s23, 1
      %p41 = por %p39, %p40
      %p42 = scmp.ne.s32.totalorder %s31, %s32
      %p43 = scmp.eq.s32.totalorder %s23, 0
      %p44 = por %p42, %p43
      %p45 = scmp.ne.s32.totalorder %s31, %s32
      %p46 = scmp.eq.s32.totalorder %s24, 1
      %p47 = por %p45, %p46
      %p49 = scmp.ne.s32.totalorder %s32, %s48
      %p50 = scmp.eq.s32.totalorder %s24, 0
      %p51 = por %p49, %p50
      %s53 = sadd.s32 %s52, 1
      %p56 = scmp.eq.s32.totalorder %s18, 1
      %p57 = scmp.ne.s32.totalorder %s52, %s54
      %p58 = scmp.eq.s32.totalorder %s18, 0
      %p59 = por %p57, %p58
      %p60 = scmp.ne.s32.totalorder %s52, %s54
      %p61 = scmp.eq.s32.totalorder %s23, 1
      %p62 = por %p60, %p61
      %p63 = scmp.ne.s32.totalorder %s54, %s55
      %p64 = scmp.eq.s32.totalorder %s23, 0
      %p65 = por %p63, %p64
      %p66 = scmp.ne.s32.totalorder %s54, %s55
      %p67 = scmp.eq.s32.totalorder %s24, 1
      %p68 = por %p66, %p67
      %p70 = scmp.ne.s32.totalorder %s55, %s69
      %p71 = scmp.eq.s32.totalorder %s24, 0
      %p72 = por %p70, %p71
      %s74 = sadd.s32 %s73, 1
      %p77 = scmp.eq.s32.totalorder %s18, 1
      %p78 = scmp.ne.s32.totalorder %s73, %s75
      %p79 = scmp.eq.s32.totalorder %s18, 0
      %p80 = por %p78, %p79
      %p81 = scmp.ne.s32.totalorder %s73, %s75
      %p82 = scmp.eq.s32.totalorder %s23, 1
      %p83 = por %p81, %p82
      %p84 = scmp.ne.s32.totalorder %s75, %s76
      %p85 = scmp.eq.s32.totalorder %s23, 0
      %p86 = por %p84, %p85
      %p87 = scmp.ne.s32.totalorder %s75, %s76
      %p88 = scmp.eq.s32.totalorder %s24, 1
      %p89 = por %p87, %p88
      %p91 = scmp.ne.s32.totalorder %s76, %s90
      %p92 = scmp.eq.s32.totalorder %s24, 0
      %p93 = por %p91, %p92
      %s95 = sadd.s32 %s94, 1
      %p98 = scmp.eq.s32.totalorder %s18, 1
      %p99 = scmp.ne.s32.totalorder %s94, %s96
      %p100 = scmp.eq.s32.totalorder %s18, 0
      %p101 = por %p99, %p100
      %p102 = scmp.ne.s32.totalorder %s94, %s96
      %p103 = scmp.eq.s32.totalorder %s23, 1
      %p104 = por %p102, %p103
      %p105 = scmp.ne.s32.totalorder %s96, %s97
      %p106 = scmp.eq.s32.totalorder %s23, 0
      %p107 = por %p105, %p106
      %p108 = scmp.ne.s32.totalorder %s96, %s97
      %p109 = scmp.eq.s32.totalorder %s24, 1
      %p110 = por %p108, %p109
      %p112 = scmp.ne.s32.totalorder %s97, %s111
      %p113 = scmp.eq.s32.totalorder %s24, 0
      %p114 = por %p112, %p113
      %s116 = sadd.s32 %s115, 1
      %p119 = scmp.eq.s32.totalorder %s18, 1
      %p120 = scmp.ne.s32.totalorder %s115, %s117
      %p121 = scmp.eq.s32.totalorder %s18, 0
      %p122 = por %p120, %p121
      %p123 = scmp.ne.s32.totalorder %s115, %s117
      %p124 = scmp.eq.s32.totalorder %s23, 1
      %p125 = por %p123, %p124
      %p126 = scmp.ne.s32.totalorder %s117, %s118
      %p127 = scmp.eq.s32.totalorder %s23, 0
      %p128 = por %p126, %p127
      %p129 = scmp.ne.s32.totalorder %s117, %s118
      %p130 = scmp.eq.s32.totalorder %s24, 1
      %p131 = por %p129, %p130
      %p133 = scmp.ne.s32.totalorder %s118, %s132
      %p134 = scmp.eq.s32.totalorder %s24, 0
      %p135 = por %p133, %p134
      %s137 = sadd.s32 %s136, 1
      %p140 = scmp.eq.s32.totalorder %s18, 1
      %p141 = scmp.ne.s32.totalorder %s136, %s138
      %p142 = scmp.eq.s32.totalorder %s18, 0
      %p143 = por %p141, %p142
      %p144 = scmp.ne.s32.totalorder %s136, %s138
      %p145 = scmp.eq.s32.totalorder %s23, 1
      %p146 = por %p144, %p145
      %p147 = scmp.ne.s32.totalorder %s138, %s139
      %p148 = scmp.eq.s32.totalorder %s23, 0
      %p149 = por %p147, %p148
      %p150 = scmp.ne.s32.totalorder %s138, %s139
      %p151 = scmp.eq.s32.totalorder %s24, 1
      %p152 = por %p150, %p151
      %p154 = scmp.ne.s32.totalorder %s139, %s153
      %p155 = scmp.eq.s32.totalorder %s24, 0
      %p156 = por %p154, %p155
      %s158 = sadd.s32 %s157, 1
      %p161 = scmp.eq.s32.totalorder %s18, 1
      %p162 = scmp.ne.s32.totalorder %s157, %s159
      %p163 = scmp.eq.s32.totalorder %s18, 0
      %p164 = por %p162, %p163
      %p165 = scmp.ne.s32.totalorder %s157, %s159
      %p166 = scmp.eq.s32.totalorder %s23, 1
      %p167 = por %p165, %p166
      %p168 = scmp.ne.s32.totalorder %s159, %s160
      %p169 = scmp.eq.s32.totalorder %s23, 0
      %p170 = por %p168, %p169
      %p171 = scmp.ne.s32.totalorder %s159, %s160
      %p172 = scmp.eq.s32.totalorder %s24, 1
      %p173 = por %p171, %p172
      %p175 = scmp.ne.s32.totalorder %s160, %s174
      %p176 = scmp.eq.s32.totalorder %s24, 0
      %p177 = por %p175, %p176
      %s178 = ssub.s32 %s18, %s25
      %p179 = scmp.eq.s32.totalorder %s178, 0
      %s181 = sadd.s32 %s180, 1
      %s182 = scalar_select %p179, %s180, %s181
      %p185 = pneg %p179
      %p186 = scmp.eq.s32.totalorder %s18, 1
      %p187 = por %p185, %p186
      %p188 = scmp.ne.s32.totalorder %s180, %s183
      %p189 = scmp.eq.s32.totalorder %s18, 0
      %p190 = por %p188, %p189
      %p191 = scmp.ne.s32.totalorder %s180, %s183
      %p192 = scmp.eq.s32.totalorder %s23, 1
      %p193 = por %p191, %p192
      %p194 = scmp.ne.s32.totalorder %s183, %s184
      %p195 = scmp.eq.s32.totalorder %s23, 0
      %p196 = por %p194, %p195
      %p197 = scmp.ne.s32.totalorder %s183, %s184
      %p198 = scmp.eq.s32.totalorder %s24, 1
      %p199 = por %p197, %p198
      %p201 = scmp.ne.s32.totalorder %s184, %s200
      %p202 = scmp.eq.s32.totalorder %s24, 0
      %p203 = por %p201, %p202
      %p204 = scmp.le.s32.totalorder 1, %s18
      %p205 = scmp.lt.s32.totalorder %s18, 3
      %p206 = pnand %p204, %p205
      %p207 = pneg %p206
      // Predicated region
      $region9: #{tpu_custom_call.1} parent=5 // pred_check
        _
      $region10: #{tpu_custom_call.1} parent=5 // pred_check_branch
        %209 = sbr.rel (%p206) target = $region12
      $region11: #{tpu_custom_call.1} parent=5 // pred_region
        %s210 = ssub.s32 %s18, 1
        // Predicated region
        $region13: #{tpu_custom_call.1} parent=11 // pred_check
          %p211 = pneg %p65
        $region14: #{tpu_custom_call.1} parent=11 // pred_check_branch
          %213 = sbr.rel (%p211) target = $region16
        $region15: #{tpu_custom_call.1} parent=11 // pred_region
          _
        $region16: #{tpu_custom_call.1} parent=11 // pred_fallthru
          _
        // Predicated region
        $region17: #{tpu_custom_call.1} parent=11 // pred_check
          %p214 = pneg %p86
        $region18: #{tpu_custom_call.1} parent=11 // pred_check_branch
          %216 = sbr.rel (%p214) target = $region20
        $region19: #{tpu_custom_call.1} parent=11 // pred_region
          _
        $region20: #{tpu_custom_call.1} parent=11 // pred_fallthru
          _
        // Predicated region
        $region21: #{tpu_custom_call.1} parent=11 // pred_check
          %p217 = pneg %p107
        $region22: #{tpu_custom_call.1} parent=11 // pred_check_branch
          %219 = sbr.rel (%p217) target = $region24
        $region23: #{tpu_custom_call.1} parent=11 // pred_region
          _
        $region24: #{tpu_custom_call.1} parent=11 // pred_fallthru
          _
        // Predicated region
        $region25: #{tpu_custom_call.1} parent=11 // pred_check
          %p220 = pneg %p128
        $region26: #{tpu_custom_call.1} parent=11 // pred_check_branch
          %222 = sbr.rel (%p220) target = $region28
        $region27: #{tpu_custom_call.1} parent=11 // pred_region
          _
        $region28: #{tpu_custom_call.1} parent=11 // pred_fallthru
          _
        // Predicated region
        $region29: #{tpu_custom_call.1} parent=11 // pred_check
          %p223 = pneg %p149
        $region30: #{tpu_custom_call.1} parent=11 // pred_check_branch
          %225 = sbr.rel (%p223) target = $region32
        $region31: #{tpu_custom_call.1} parent=11 // pred_region
          _
        $region32: #{tpu_custom_call.1} parent=11 // pred_fallthru
          _
        // Predicated region
        $region33: #{tpu_custom_call.1} parent=11 // pred_check
          %p226 = pneg %p170
        $region34: #{tpu_custom_call.1} parent=11 // pred_check_branch
          %228 = sbr.rel (%p226) target = $region36
        $region35: #{tpu_custom_call.1} parent=11 // pred_region
          _
        $region36: #{tpu_custom_call.1} parent=11 // pred_fallthru
          _
      $region12: #{tpu_custom_call.1} parent=5 // pred_fallthru
        _
      %p229 = scmp.lt.s32.totalorder %s18, 2
      // Predicated region
      $region37: #{tpu_custom_call.1} parent=5 // pred_check
        %p230 = pneg %p229
      $region38: #{tpu_custom_call.1} parent=5 // pred_check_branch
        %232 = sbr.rel (%p230) target = $region40
      $region39: #{tpu_custom_call.1} parent=5 // pred_region
        // Predicated region
        $region41: #{tpu_custom_call.1} parent=39 // pred_check
          %p233 = pneg %p38
        $region42: #{tpu_custom_call.1} parent=39 // pred_check_branch
          %235 = sbr.rel (%p233) target = $region44
        $region43: #{tpu_custom_call.1} parent=39 // pred_region
          %p236 = scmp.lt.s32.totalorder %s18, 1
          %s237 = scalar_select %p236, %s18, 1
          %s238 = smul.addr %s237, 2
          %s239 = scalar_lea.vmem %s0, %s238
        $region44: #{tpu_custom_call.1} parent=39 // pred_fallthru
          _
      $region40: #{tpu_custom_call.1} parent=5 // pred_fallthru
        _
      %p240 = scmp.le.s32.totalorder 1, %s18
      %p241 = scmp.lt.s32.totalorder %s18, 3
      %p242 = pnand %p240, %p241
      %p243 = pneg %p242
      // Predicated region
      $region45: #{tpu_custom_call.1} parent=5 // pred_check
        _
      $region46: #{tpu_custom_call.1} parent=5 // pred_check_branch
        %245 = sbr.rel (%p242) target = $region48
      $region47: #{tpu_custom_call.1} parent=5 // pred_region
        %s246 = ssub.s32 %s18, 1
        %p247 = scmp.lt.s32.totalorder %s23, 1
        %s248 = scalar_select %p247, %s23, 1
        %s249 = smul.addr %s248, 2
        %s250 = scalar_lea.vmem %s0, %s249
        %p251 = pneg %p44
        %p252 = pneg %p41
        %p253 = pneg %p65
        %p254 = pneg %p62
        %p255 = pneg %p86
        %p256 = pneg %p83
        %p257 = pneg %p107
        %p258 = pneg %p104
        %p259 = pneg %p128
        %p260 = pneg %p125
        %p261 = pneg %p149
        %p262 = pneg %p146
        %p263 = pneg %p170
        %p264 = pneg %p167
        %p265 = pneg %p196
        %p266 = pneg %p193
        %s267 = sand.u32 %s183, 1
        %s268 = scalar_lea.sflag [#allocation4], %s267
        %s269 = sand.u32 %s183, 1
        %s270 = scalar_lea.vmem [#allocation3], %s269
        %p271 = scmp.lt.s32.totalorder %s23, 1
        %s272 = scalar_select %p271, %s23, 1
        %s273 = smul.addr %s272, 2
        %s274 = scalar_lea.vmem %s0, %s273
        %v275 = vld [vmem:[%s274] sm:$0x1]
        %v276 = vld [vmem:[%s274 + $0x1] sm:$0x1]
        %v277 = vld [vmem:[%s1] sm:$0xff]
        %v278 = vld [vmem:[%s1 + $0x8] sm:$0xff]
        %v279 = vld [vmem:[%s1 + $0x10] sm:$0xff]
        %v280 = vld [vmem:[%s1 + $0x18] sm:$0xff]
        %282 = vset.pattern.permute.xlu0 0
        %283 = vperm.xlu0 %282, %v277
        %v284 = vpop.permute.xlu0 %283
        %287 = vset.pattern.permute.xlu0 0
        %288 = vperm.xlu0 %287, %v278
        %v289 = vpop.permute.xlu0 %288
        %292 = vset.pattern.permute.xlu0 0
        %293 = vperm.xlu0 %292, %v279
        %v294 = vpop.permute.xlu0 %293
        %297 = vset.pattern.permute.xlu0 0
        %298 = vperm.xlu0 %297, %v280
        %v299 = vpop.permute.xlu0 %298
        %v301 = vperm.slane %v275, 0
        %v302 = vmul.f32 %v284, %v301
        %v303 = vmul.f32 %v289, %v301
        %v304 = vmul.f32 %v294, %v301
        %v305 = vmul.f32 %v299, %v301
        %306 = vset.pattern.permute.xlu0 1
        %307 = vperm.xlu0 %306, %v277
        %v308 = vpop.permute.xlu0 %307
        %310 = vset.pattern.permute.xlu0 1
        %311 = vperm.xlu0 %310, %v278
        %v312 = vpop.permute.xlu0 %311
        %314 = vset.pattern.permute.xlu0 1
        %315 = vperm.xlu0 %314, %v279
        %v316 = vpop.permute.xlu0 %315
        %318 = vset.pattern.permute.xlu0 1
        %319 = vperm.xlu0 %318, %v280
        %v320 = vpop.permute.xlu0 %319
        %v322 = vperm.slane %v276, 0
        %v323 = vmul.f32 %v308, %v322
        %v324 = vmul.f32 %v312, %v322
        %v325 = vmul.f32 %v316, %v322
        %v326 = vmul.f32 %v320, %v322
        %v327 = vadd.f32 %v302, %v323
        %v328 = vadd.f32 %v303, %v324
        %v329 = vadd.f32 %v304, %v325
        %v330 = vadd.f32 %v305, %v326
        %v331 = vld [vmem:[%s2] sm:$0xff]
        %v332 = vld [vmem:[%s2 + $0x8] sm:$0xff]
        %v333 = vld [vmem:[%s2 + $0x10] sm:$0xff]
        %v334 = vld [vmem:[%s2 + $0x18] sm:$0xff]
        %336 = vset.pattern.permute.xlu0 0
        %337 = vperm.xlu0 %336, %v331
        %v338 = vpop.permute.xlu0 %337
        %341 = vset.pattern.permute.xlu0 0
        %342 = vperm.xlu0 %341, %v332
        %v343 = vpop.permute.xlu0 %342
        %346 = vset.pattern.permute.xlu0 0
        %347 = vperm.xlu0 %346, %v333
        %v348 = vpop.permute.xlu0 %347
        %351 = vset.pattern.permute.xlu0 0
        %352 = vperm.xlu0 %351, %v334
        %v353 = vpop.permute.xlu0 %352
        %v355 = vadd.f32 %v327, %v338
        %v356 = vadd.f32 %v328, %v343
        %v357 = vadd.f32 %v329, %v348
        %v358 = vadd.f32 %v330, %v353
        %v359 = vtanh.pop %v355
        %v360 = vtanh.pop %v356
        %v361 = vtanh.pop %v357
        %v362 = vtanh.pop %v358
        %v363 = vld [vmem:[%s3] sm:$0xff]
        %v364 = vld [vmem:[%s3 + $0x8] sm:$0xff]
        %v365 = vld [vmem:[%s3 + $0x10] sm:$0xff]
        %v366 = vld [vmem:[%s3 + $0x18] sm:$0xff]
        %v367 = vld [vmem:[%s4] sm:$0xff]
        %v368 = vld [vmem:[%s4 + $0x8] sm:$0xff]
        %v369 = vld [vmem:[%s4 + $0x10] sm:$0xff]
        %v370 = vld [vmem:[%s4 + $0x18] sm:$0xff]
        %372 = vset.pattern.permute.xlu0 0
        %373 = vperm.xlu0 %372, %v367
        %v374 = vpop.permute.xlu0 %373
        %377 = vset.pattern.permute.xlu0 0
        %378 = vperm.xlu0 %377, %v368
        %v379 = vpop.permute.xlu0 %378
        %382 = vset.pattern.permute.xlu0 0
        %383 = vperm.xlu0 %382, %v369
        %v384 = vpop.permute.xlu0 %383
        %387 = vset.pattern.permute.xlu0 0
        %388 = vperm.xlu0 %387, %v370
        %v389 = vpop.permute.xlu0 %388
        %vm391 = vcmask 261120
        %v393 = vsel %vm391, %v363, 0
        %v396 = vsel %vm391, %v364, 0
        %v399 = vsel %vm391, %v365, 0
        %v402 = vsel %vm391, %v366, 0
        %404 = vmatpush.msra.mxu0 0.0
        %405 = vmatpush.msra.mxu0 0.0
        %406 = vmatpush.msra.mxu0 0.0
        %407 = vmatpush.msra.mxu0 0.0
        %408 = vmatpush.msra.mxu0 0.0
        %409 = vmatpush.msra.mxu0 0.0
        %410 = vmatpush.msra.mxu0 0.0
        %411 = vmatpush.msra.mxu0 0.0
        %412 = vmatpush.msra.mxu0 0.0
        %413 = vmatpush.msra.mxu0 0.0
        %414 = vmatpush.msra.mxu0 0.0
        %415 = vmatpush.msra.mxu0 0.0
        %416 = vmatpush.msra.mxu0 %v362
        %417 = vmatpush.msra.mxu0 %v361
        %418 = vmatpush.msra.mxu0 %v360
        %419 = vmatpush.msra.mxu0 %v359
        %420 = vmatmul.f32.gmra.mxu0 %v393
        %v421 = vpop.f32.mrf.mxu0
        %v422 = vadd.f32 %v374, %v421
        %423 = vmatmul.f32.gmra.mxu0 %v396
        %v424 = vpop.f32.mrf.mxu0
        %v425 = vadd.f32 %v379, %v424
        %426 = vmatmul.f32.gmra.mxu0 %v399
        %v427 = vpop.f32.mrf.mxu0
        %v428 = vadd.f32 %v384, %v427
        %429 = vmatmul.f32.gmra.mxu0 %v402
        %v430 = vpop.f32.mrf.mxu0
        %v431 = vadd.f32 %v389, %v430
        %432 = vdwg.mxu0
        %v433 = vtanh.pop %v422
        %v434 = vtanh.pop %v425
        %v435 = vtanh.pop %v428
        %v436 = vtanh.pop %v431
        %s437 = scalar_lea.vmem %s3, 32
        %v438 = vld [vmem:[%s437] sm:$0xff]
        %v439 = vld [vmem:[%s437 + $0x8] sm:$0xff]
        %v440 = vld [vmem:[%s437 + $0x10] sm:$0xff]
        %v441 = vld [vmem:[%s437 + $0x18] sm:$0xff]
        %s442 = scalar_lea.vmem %s4, 32
        %v443 = vld [vmem:[%s442] sm:$0xff]
        %v444 = vld [vmem:[%s442 + $0x8] sm:$0xff]
        %v445 = vld [vmem:[%s442 + $0x10] sm:$0xff]
        %v446 = vld [vmem:[%s442 + $0x18] sm:$0xff]
        %448 = vset.pattern.permute.xlu0 0
        %449 = vperm.xlu0 %448, %v443
        %v450 = vpop.permute.xlu0 %449
        %453 = vset.pattern.permute.xlu0 0
        %454 = vperm.xlu0 %453, %v444
        %v455 = vpop.permute.xlu0 %454
        %458 = vset.pattern.permute.xlu0 0
        %459 = vperm.xlu0 %458, %v445
        %v460 = vpop.permute.xlu0 %459
        %463 = vset.pattern.permute.xlu0 0
        %464 = vperm.xlu0 %463, %v446
        %v465 = vpop.permute.xlu0 %464
        %v468 = vsel %vm391, %v438, 0
        %v471 = vsel %vm391, %v439, 0
        %v474 = vsel %vm391, %v440, 0
        %v477 = vsel %vm391, %v441, 0
        %479 = vmatpush.msra.mxu0 0.0
        %480 = vmatpush.msra.mxu0 0.0
        %481 = vmatpush.msra.mxu0 0.0
        %482 = vmatpush.msra.mxu0 0.0
        %483 = vmatpush.msra.mxu0 0.0
        %484 = vmatpush.msra.mxu0 0.0
        %485 = vmatpush.msra.mxu0 0.0
        %486 = vmatpush.msra.mxu0 0.0
        %487 = vmatpush.msra.mxu0 0.0
        %488 = vmatpush.msra.mxu0 0.0
        %489 = vmatpush.msra.mxu0 0.0
        %490 = vmatpush.msra.mxu0 0.0
        %491 = vmatpush.msra.mxu0 %v436
        %492 = vmatpush.msra.mxu0 %v435
        %493 = vmatpush.msra.mxu0 %v434
        %494 = vmatpush.msra.mxu0 %v433
        %495 = vmatmul.f32.gmra.mxu0 %v468
        %v496 = vpop.f32.mrf.mxu0
        %v497 = vadd.f32 %v450, %v496
        %498 = vmatmul.f32.gmra.mxu0 %v471
        %v499 = vpop.f32.mrf.mxu0
        %v500 = vadd.f32 %v455, %v499
        %501 = vmatmul.f32.gmra.mxu0 %v474
        %v502 = vpop.f32.mrf.mxu0
        %v503 = vadd.f32 %v460, %v502
        %504 = vmatmul.f32.gmra.mxu0 %v477
        %v505 = vpop.f32.mrf.mxu0
        %v506 = vadd.f32 %v465, %v505
        %507 = vdwg.mxu0
        %v508 = vtanh.pop %v497
        %v509 = vtanh.pop %v500
        %v510 = vtanh.pop %v503
        %v511 = vtanh.pop %v506
        %v512 = vld [vmem:[%s5] sm:$0xff]
        %v513 = vld [vmem:[%s5 + $0x8] sm:$0xff]
        %v514 = vld [vmem:[%s5 + $0x10] sm:$0xff]
        %v515 = vld [vmem:[%s5 + $0x18] sm:$0xff]
        %517 = vset.pattern.permute.xlu0 0
        %518 = vperm.xlu0 %517, %v512
        %v519 = vpop.permute.xlu0 %518
        %522 = vset.pattern.permute.xlu0 0
        %523 = vperm.xlu0 %522, %v513
        %v524 = vpop.permute.xlu0 %523
        %527 = vset.pattern.permute.xlu0 0
        %528 = vperm.xlu0 %527, %v514
        %v529 = vpop.permute.xlu0 %528
        %532 = vset.pattern.permute.xlu0 0
        %533 = vperm.xlu0 %532, %v515
        %v534 = vpop.permute.xlu0 %533
        %v536 = vmul.f32 %v508, %v519
        %v537 = vmul.f32 %v509, %v524
        %v538 = vmul.f32 %v510, %v529
        %v539 = vmul.f32 %v511, %v534
        %v540 = vadd.f32 %v536, %v537
        %v541 = vadd.f32 %v540, %v538
        %v542 = vadd.f32 %v541, %v539
        %v543 = vrot.slane %v542, 4
        %v544 = vadd.f32 %v542, %v543
        %v545 = vrot.slane %v544, 2
        %v546 = vadd.f32 %v544, %v545
        %v547 = vrot.slane %v546, 1
        %v548 = vadd.f32 %v546, %v547
        %v549 = vld [vmem:[#allocation2] sm:$0x1]
        %551 = vset.pattern.permute.xlu0 0
        %552 = vperm.xlu0 %551, %v549
        %v553 = vpop.permute.xlu0 %552
        %v555 = vperm.slane %v553, 0
        %v556 = vadd.f32 %v548, %v555
        %557 = vst [vmem:[%s270] sm:$0x1] %v556
        %s558 = sand.u32 %s183, 1
        %s559 = scalar_lea.sflag [#allocation4], %s558
        %s560 = sand.u32 %s183, 1
        %s561 = scalar_lea.vmem [#allocation3], %s560
        // Predicated region
        $region49: #{tpu_custom_call.1} parent=47 // pred_check
          %p562 = pneg %p193
        $region50: #{tpu_custom_call.1} parent=47 // pred_check_branch
          %564 = sbr.rel (%p562) target = $region52
        $region51: #{tpu_custom_call.1} parent=47 // pred_region
          %566 = vsyncadd %s559, 0
          %s567 = scalar_lea.hbm %s7, %s23
          %s569 = sshll.u32 %s561, 4
          %s570 = int_to_ptr.vmem [resolvable:$true] %s569
          %s571 = sshll.u32 %s567, 4
          %s572 = int_to_ptr.hbm [resolvable:$true] %s571
          %574 = dma.vmem_to_hbm [thread:$0]  %s570, 16, %s572, %s559
        $region52: #{tpu_custom_call.1} parent=47 // pred_fallthru
          _
      $region48: #{tpu_custom_call.1} parent=5 // pred_fallthru
        _
      %p575 = scmp.le.s32.totalorder 2, %s18
      // Predicated region
      $region53: #{tpu_custom_call.1} parent=5 // pred_check
        %p576 = pneg %p575
      $region54: #{tpu_custom_call.1} parent=5 // pred_check_branch
        %578 = sbr.rel (%p576) target = $region56
      $region55: #{tpu_custom_call.1} parent=5 // pred_region
        %s579 = ssub.s32 %s18, 2
        // Predicated region
        $region57: #{tpu_custom_call.1} parent=55 // pred_check
          %p580 = pneg %p199
        $region58: #{tpu_custom_call.1} parent=55 // pred_check_branch
          %582 = sbr.rel (%p580) target = $region60
        $region59: #{tpu_custom_call.1} parent=55 // pred_region
          %s583 = sand.u32 %s184, 1
          %s584 = scalar_lea.sflag [#allocation4], %s583
          %s585 = sand.u32 %s184, 1
          %s586 = scalar_lea.vmem [#allocation3], %s585
          %588 = dma.done %s584, 16
        $region60: #{tpu_custom_call.1} parent=55 // pred_fallthru
          _
      $region56: #{tpu_custom_call.1} parent=5 // pred_fallthru
        _
    $region6: #{tpu_custom_call.1} parent=1 // loop_footer
      %s22 = sadd.s32 1, %s18
    $region7: #{tpu_custom_call.1} parent=1 // loop_footer_branch
      %17 = sbr.rel target = $region3
    $region8: #{tpu_custom_call.1} parent=1 // loop_exit
      _
    %589 = vsyncpa [#allocation4], 1
    %s590 = scalar_lea.sflag [#allocation4], 1
    %591 = vsyncpa %s590, 1

</llo_original>
